<compile_context>
chip_gen: v7x
topology: tpu7x:2x2x1
jax: 0.10.0
libtpu: 0.0.40
codegen_flags: <defaults>
</compile_context>

<pallas_src>
import jax
import jax.numpy as jnp
from jax.experimental import pallas as pl
from jax.experimental.pallas import tpu as pltpu


def _mvn_diag_logprob_kernel(x_ref, mean_ref, inv_scale_ref, bsel_ref,
                             const_ref, out_ref):
    # x_ref:         (TN, PD)  packed samples, PD = P*d (=128 for d=32)
    # mean_ref:      (1, PD)   mean tiled P times
    # inv_scale_ref: (1, PD)   1/clamped_scale tiled P times
    # bsel_ref:      (PD, P)   block-diagonal selector (bf16), entries -0.5 / 0
    # const_ref:     (1, 1)    -0.5*d*log(2pi) - sum(log(scale))
    # out_ref:       (TN, P)   log_prob for the P samples packed in each row
    z = (x_ref[...] - mean_ref[...]) * inv_scale_ref[...]   # VPU, full 128 lanes
    zz = z * z                                               # VPU (f32, exact)

    # Two-term bf16 split of zz -> two single-pass bf16 MXU matmuls with f32
    # accumulation.  Near-f32 accuracy with a deterministic, small MXU cost.
    zz_hi = zz.astype(jnp.bfloat16)
    zz_lo = (zz - zz_hi.astype(jnp.float32)).astype(jnp.bfloat16)
    sel = bsel_ref[...]
    maha = (jnp.dot(zz_hi, sel, preferred_element_type=jnp.float32)
            + jnp.dot(zz_lo, sel, preferred_element_type=jnp.float32))

    out_ref[...] = maha + const_ref[...]


def _round_up(a, m):
    return ((a + m - 1) // m) * m


def mvn_diag_logprob(x, mean, cov, *, block_rows=4096):
    """x: (N, d), mean: (d,), cov: (d,) diagonal scale  ->  log_prob: (N,)."""
    x = jnp.asarray(x, jnp.float32)
    mean = jnp.asarray(mean, jnp.float32)
    scale = jnp.maximum(jnp.asarray(cov, jnp.float32), 1e-6)  # clamp from forward()

    N, d = x.shape

    # Pack P samples per 128-lane row when d divides 128; otherwise fall back
    # to one sample per row (d on the lane axis).
    if d <= 128 and 128 % d == 0:
        P = 128 // d
    else:
        P = 1
    packed_d = P * d

    # Hoisted, computed once on the tiny (d,) vectors (exact f32 reciprocal).
    inv_scale = 1.0 / scale
    const = (-0.5 * d * jnp.log(2.0 * jnp.pi)
             - jnp.sum(jnp.log(scale))).reshape(1, 1).astype(jnp.float32)

    mean_t = jnp.tile(mean, (P,)).reshape(1, packed_d)
    inv_scale_t = jnp.tile(inv_scale, (P,)).reshape(1, packed_d)

    # Block-diagonal selector: bsel[l, g] = -0.5 if lane l belongs to group g.
    # -0.5 and 0 are exactly representable in bf16.
    lane = jnp.arange(packed_d)
    bsel = jnp.where((lane[:, None] // d) == jnp.arange(P)[None, :],
                     -0.5, 0.0).astype(jnp.bfloat16)

    # Batch tiling (packed rows). Keep block a multiple of 8 sublanes and pad
    # the batch so the grid divides evenly; padded rows are dropped at the end.
    block_rows = max(8, (int(block_rows) // 8) * 8)
    np_raw = (N + P - 1) // P
    block_rows = min(block_rows, _round_up(np_raw, 8))
    np_pad = _round_up(np_raw, block_rows)
    n_pad = np_pad * P

    if n_pad != N:
        x = jnp.pad(x, ((0, n_pad - N), (0, 0)))
    x_packed = x.reshape(np_pad, packed_d)  # free: row-major contiguous

    grid = (np_pad // block_rows,)

    out = pl.pallas_call(
        _mvn_diag_logprob_kernel,
        out_shape=jax.ShapeDtypeStruct((np_pad, P), jnp.float32),
        grid=grid,
        in_specs=[
            pl.BlockSpec((block_rows, packed_d), lambda i: (i, 0)),  # x tile
            pl.BlockSpec((1, packed_d), lambda i: (0, 0)),           # mean
            pl.BlockSpec((1, packed_d), lambda i: (0, 0)),           # inv_scale
            pl.BlockSpec((packed_d, P), lambda i: (0, 0)),           # selector
            pl.BlockSpec((1, 1), lambda i: (0, 0)),                  # const
        ],
        out_specs=pl.BlockSpec((block_rows, P), lambda i: (i, 0)),
        compiler_params=pltpu.CompilerParams(
            dimension_semantics=("parallel",),        # shard blocks across TCs
            vmem_limit_bytes=32 * 1024 * 1024,        # explicit, generous on all gens
        ),
    )(x_packed, mean_t, inv_scale_t, bsel, const)

    # (np_pad, P) row-major == original sample order; drop padded rows.
    return out.reshape(n_pad)[:N]


def mvn_diag_logprob_ref(x, mean, cov):
    """Pure-JAX reference for correctness checking."""
    scale = jnp.maximum(cov, 1e-6)
    z = (x - mean[None, :]) / scale[None, :]
    d = x.shape[-1]
    return (-0.5 * jnp.sum(z * z, axis=-1)
            - 0.5 * d * jnp.log(2.0 * jnp.pi)
            - jnp.sum(jnp.log(scale)))


if __name__ == "__main__":
    # NormalModel(d=32)-style parameters; deterministic non-trivial values.
    d = 32
    key = jax.random.PRNGKey(0)
    km, ks, kx = jax.random.split(key, 3)
    mean = 0.1 * jax.random.normal(km, (d,), dtype=jnp.float32)
    cov = 0.5 + jax.random.uniform(ks, (d,), dtype=jnp.float32)  # positive scales

    # (N, block_rows): aligned small case, padding case, and a multi-block grid.
    cases = [(256, 4096), (37, 4096), (5000, 512)]
    for i, (N, br) in enumerate(cases):
        x = jax.random.normal(jax.random.fold_in(kx, i), (N, d), dtype=jnp.float32)
        out = jax.block_until_ready(mvn_diag_logprob(x, mean, cov, block_rows=br))
        ref = mvn_diag_logprob_ref(x, mean, cov)
        assert out.shape == (N,)
        # Two-term bf16 split keeps the MXU reduction near-f32 accurate, so the
        # tolerance can be tight.
        assert jnp.allclose(out, ref, rtol=1e-3, atol=1e-3), (
            N, float(jnp.max(jnp.abs(out - ref))))

    print("KERNEL_OK")
</pallas_src>

<mosaic_0001>
module attributes {stable_mosaic.version = 11 : i64} {
  func.func @_mvn_diag_logprob_kernel(%arg0: i32, %arg1: memref<64x128xf32, #tpu.memory_space<vmem>>, %arg2: memref<1x128xf32, #tpu.memory_space<vmem>>, %arg3: memref<1x128xf32, #tpu.memory_space<vmem>>, %arg4: memref<128x4xbf16, #tpu.memory_space<vmem>>, %arg5: memref<1x1xf32, #tpu.memory_space<vmem>>, %arg6: memref<64x4xf32, #tpu.memory_space<vmem>>) attributes {dimension_semantics = [#tpu.dimension_semantics<parallel>], iteration_bounds = array<i64: 1>, scalar_prefetch = 0 : i64, scratch_operands = 0 : i64, tpu.core_type = #tpu.core_type<tc>, window_params = [{transform_indices = @transform_0, window_bounds = array<i64: 64, 128>}, {pipeline_mode = #tpu.pipeline_mode<synchronous>, transform_indices = @transform_1, window_bounds = array<i64: 1, 128>}, {pipeline_mode = #tpu.pipeline_mode<synchronous>, transform_indices = @transform_2, window_bounds = array<i64: 1, 128>}, {pipeline_mode = #tpu.pipeline_mode<synchronous>, transform_indices = @transform_3, window_bounds = array<i64: 128, 4>}, {pipeline_mode = #tpu.pipeline_mode<synchronous>, transform_indices = @transform_4, window_bounds = array<i64: 1, 1>}, {transform_indices = @transform_5, window_bounds = array<i64: 64, 4>}]} {
    %c0 = arith.constant 0 : index
    %c0_0 = arith.constant 0 : index
    %0 = vector.load %arg1[%c0, %c0_0] : memref<64x128xf32, #tpu.memory_space<vmem>>, vector<64x128xf32>
    %c0_1 = arith.constant 0 : index
    %c0_2 = arith.constant 0 : index
    %1 = vector.load %arg2[%c0_1, %c0_2] : memref<1x128xf32, #tpu.memory_space<vmem>>, vector<1x128xf32>
    %2 = vector.broadcast %1 : vector<1x128xf32> to vector<64x128xf32>
    %3 = arith.subf %0, %2 : vector<64x128xf32>
    %c0_3 = arith.constant 0 : index
    %c0_4 = arith.constant 0 : index
    %4 = vector.load %arg3[%c0_3, %c0_4] : memref<1x128xf32, #tpu.memory_space<vmem>>, vector<1x128xf32>
    %5 = vector.broadcast %4 : vector<1x128xf32> to vector<64x128xf32>
    %6 = arith.mulf %3, %5 : vector<64x128xf32>
    %7 = arith.mulf %6, %6 : vector<64x128xf32>
    %8 = arith.truncf %7 : vector<64x128xf32> to vector<64x128xbf16>
    %9 = arith.extf %8 : vector<64x128xbf16> to vector<64x128xf32>
    %10 = arith.subf %7, %9 : vector<64x128xf32>
    %11 = arith.truncf %10 : vector<64x128xf32> to vector<64x128xbf16>
    %c0_5 = arith.constant 0 : index
    %c0_6 = arith.constant 0 : index
    %12 = vector.load %arg4[%c0_5, %c0_6] : memref<128x4xbf16, #tpu.memory_space<vmem>>, vector<128x4xbf16>
    %cst = arith.constant dense<0.000000e+00> : vector<64x4xf32>
    %13 = tpu.matmul %8, %12, %cst {dimension_numbers = #tpu.dot_dimension_numbers<[1], [0], [0], [1], [0, 0, 1, 1], [], []>} : vector<64x128xbf16>, vector<128x4xbf16>, vector<64x4xf32> -> vector<64x4xf32>
    %cst_7 = arith.constant dense<0.000000e+00> : vector<64x4xf32>
    %14 = tpu.matmul %11, %12, %cst_7 {dimension_numbers = #tpu.dot_dimension_numbers<[1], [0], [0], [1], [0, 0, 1, 1], [], []>} : vector<64x128xbf16>, vector<128x4xbf16>, vector<64x4xf32> -> vector<64x4xf32>
    %15 = arith.addf %13, %14 : vector<64x4xf32>
    %c0_8 = arith.constant 0 : index
    %c0_9 = arith.constant 0 : index
    %16 = vector.load %arg5[%c0_8, %c0_9] : memref<1x1xf32, #tpu.memory_space<vmem>>, vector<1x1xf32>
    %17 = vector.broadcast %16 : vector<1x1xf32> to vector<64x4xf32>
    %18 = arith.addf %15, %17 : vector<64x4xf32>
    %c0_10 = arith.constant 0 : index
    %c0_11 = arith.constant 0 : index
    %19 = vector.load %arg6[%c0_10, %c0_11] : memref<64x4xf32, #tpu.memory_space<vmem>>, vector<64x4xf32>
    tpu.vector_store %arg6[%c0_10, %c0_11], %18 {strides = array<i32>} : memref<64x4xf32, #tpu.memory_space<vmem>>, vector<64x4xf32>,
    return
  }
  func.func @transform_0(%arg0: i32) -> (i32, i32) {
    %c0_i32 = arith.constant 0 : i32
    %c0_i32_0 = arith.constant 0 : i32
    return %arg0, %c0_i32 : i32, i32
  }
  func.func @transform_1(%arg0: i32) -> (i32, i32) {
    %c0_i32 = arith.constant 0 : i32
    %c0_i32_0 = arith.constant 0 : i32
    %c0_i32_1 = arith.constant 0 : i32
    return %c0_i32, %c0_i32_0 : i32, i32
  }
  func.func @transform_2(%arg0: i32) -> (i32, i32) {
    %c0_i32 = arith.constant 0 : i32
    %c0_i32_0 = arith.constant 0 : i32
    %c0_i32_1 = arith.constant 0 : i32
    return %c0_i32, %c0_i32_0 : i32, i32
  }
  func.func @transform_3(%arg0: i32) -> (i32, i32) {
    %c0_i32 = arith.constant 0 : i32
    %c0_i32_0 = arith.constant 0 : i32
    %c0_i32_1 = arith.constant 0 : i32
    return %c0_i32, %c0_i32_0 : i32, i32
  }
  func.func @transform_4(%arg0: i32) -> (i32, i32) {
    %c0_i32 = arith.constant 0 : i32
    %c0_i32_0 = arith.constant 0 : i32
    %c0_i32_1 = arith.constant 0 : i32
    return %c0_i32, %c0_i32_0 : i32, i32
  }
  func.func @transform_5(%arg0: i32) -> (i32, i32) {
    %c0_i32 = arith.constant 0 : i32
    %c0_i32_0 = arith.constant 0 : i32
    return %arg0, %c0_i32 : i32, i32
  }
}

</mosaic_0001>

<llo_original>
// kernel: tpu_custom_call.1
$region0: #{tpu_custom_call.1}
  #allocation0 [shape = 'u32[]', space=smem, size = 0x4, offset = 0x4, fixed_abs, tag = 'smem constant byte address 0x4 - core index']
  #allocation1 [shape = 'u32[144,128]{1,0:T(1,128)}', space=vmem, size = 0x12000, scoped, tag = 'internal scratch']
  #allocation2 [shape = 'f32[1,1]{1,0:T(1,128)S(1)}', space=vmem, size = 0x200, scoped, tag = 'scoped memory for tpu_custom_call.1']
  %s0 = inlined_call_operand.vmem [shape: f32[64,128], index: 0, kind: input, shape index: {}]
  %s1 = inlined_call_operand.vmem [shape: f32[1,128], index: 1, kind: input, shape index: {}]
  %s2 = inlined_call_operand.vmem [shape: f32[1,128], index: 2, kind: input, shape index: {}]
  %s3 = inlined_call_operand.vmem [shape: bf16[128,4], index: 3, kind: input, shape index: {}]
  %s4 = inlined_call_operand.<no memory space> [shape: f32[1,1], index: 4, kind: input, shape index: {}]
  %s5 = inlined_call_operand.vmem [shape: f32[64,4], index: 5, kind: output, shape index: {}]
  %s6 = sld [smem:[#allocation0]]
  $region30: #{tpu_custom_call.1} parent=0
    _
  %s8 = ssub.s32 1, %s6
  %s9 = scalar_select 0, %s8, %s6
  %v10 = vstv %s4
  %11 = vst [vmem:[#allocation2] sm:$0x1] %v10
  // Predicated region
  $region2: #{tpu_custom_call.1} parent=0 // pred_check
    _
  $region3: #{tpu_custom_call.1} parent=0 // pred_check_branch
    %13 = sbr.rel (0) target = $region5
  $region4: #{tpu_custom_call.1} parent=0 // pred_region
    _
  $region5: #{tpu_custom_call.1} parent=0 // pred_fallthru
    _
  // Predicated region
  $region6: #{tpu_custom_call.1} parent=0 // pred_check
    _
  $region7: #{tpu_custom_call.1} parent=0 // pred_check_branch
    %15 = sbr.rel (0) target = $region9
  $region8: #{tpu_custom_call.1} parent=0 // pred_region
    _
  $region9: #{tpu_custom_call.1} parent=0 // pred_fallthru
    _
  // Predicated region
  $region10: #{tpu_custom_call.1} parent=0 // pred_check
    _
  $region11: #{tpu_custom_call.1} parent=0 // pred_check_branch
    %17 = sbr.rel (0) target = $region13
  $region12: #{tpu_custom_call.1} parent=0 // pred_region
    _
  $region13: #{tpu_custom_call.1} parent=0 // pred_fallthru
    _
  // Predicated region
  $region14: #{tpu_custom_call.1} parent=0 // pred_check
    _
  $region15: #{tpu_custom_call.1} parent=0 // pred_check_branch
    %19 = sbr.rel (0) target = $region17
  $region16: #{tpu_custom_call.1} parent=0 // pred_region
    _
  $region17: #{tpu_custom_call.1} parent=0 // pred_fallthru
    _
  // Predicated region
  $region18: #{tpu_custom_call.1} parent=0 // pred_check
    _
  $region19: #{tpu_custom_call.1} parent=0 // pred_check_branch
    %21 = sbr.rel (0) target = $region21
  $region20: #{tpu_custom_call.1} parent=0 // pred_region
    _
  $region21: #{tpu_custom_call.1} parent=0 // pred_fallthru
    _
  %v23 = vld [vmem:[%s0] sm:$0xff]
  %v24 = vld [vmem:[%s0 + $0x8] sm:$0xff]
  %v25 = vld [vmem:[%s0 + $0x10] sm:$0xff]
  %v26 = vld [vmem:[%s0 + $0x18] sm:$0xff]
  %v27 = vld [vmem:[%s0 + $0x20] sm:$0xff]
  %v28 = vld [vmem:[%s0 + $0x28] sm:$0xff]
  %v29 = vld [vmem:[%s0 + $0x30] sm:$0xff]
  %v30 = vld [vmem:[%s0 + $0x38] sm:$0xff]
  %v31 = vld [vmem:[%s1] sm:$0x1]
  %v33 = vlaneseq
  %v34 = vshrl.u32 %v33, 7
  %v35 = vsub.s32 0, %v34
  %v36 = vrot.slane %v31, %v35
  %v38 = vsub.f32 %v23, %v36
  %v39 = vsub.f32 %v24, %v36
  %v40 = vsub.f32 %v25, %v36
  %v41 = vsub.f32 %v26, %v36
  %v42 = vsub.f32 %v27, %v36
  %v43 = vsub.f32 %v28, %v36
  %v44 = vsub.f32 %v29, %v36
  %v45 = vsub.f32 %v30, %v36
  %v46 = vld [vmem:[%s2] sm:$0x1]
  %v48 = vlaneseq
  %v49 = vshrl.u32 %v48, 7
  %v50 = vsub.s32 0, %v49
  %v51 = vrot.slane %v46, %v50
  %v53 = vmul.f32 %v38, %v51
  %v54 = vmul.f32 %v39, %v51
  %v55 = vmul.f32 %v40, %v51
  %v56 = vmul.f32 %v41, %v51
  %v57 = vmul.f32 %v42, %v51
  %v58 = vmul.f32 %v43, %v51
  %v59 = vmul.f32 %v44, %v51
  %v60 = vmul.f32 %v45, %v51
  %v61 = vmul.f32 %v53, %v53
  %v62 = vmul.f32 %v54, %v54
  %v63 = vmul.f32 %v55, %v55
  %v64 = vmul.f32 %v56, %v56
  %v65 = vmul.f32 %v57, %v57
  %v66 = vmul.f32 %v58, %v58
  %v67 = vmul.f32 %v59, %v59
  %v68 = vmul.f32 %v60, %v60
  %v69 = vpack.c.bf16 %v62, %v61
  %v70 = vpack.c.bf16 %v64, %v63
  %v71 = vpack.c.bf16 %v66, %v65
  %v72 = vpack.c.bf16 %v68, %v67
  %v73 = vunpack.c.l.bf16 %v69
  %v74 = vunpack.c.h.bf16 %v69
  %v75 = vunpack.c.l.bf16 %v70
  %v76 = vunpack.c.h.bf16 %v70
  %v77 = vunpack.c.l.bf16 %v71
  %v78 = vunpack.c.h.bf16 %v71
  %v79 = vunpack.c.l.bf16 %v72
  %v80 = vunpack.c.h.bf16 %v72
  %v81 = vsub.f32 %v61, %v73
  %v82 = vsub.f32 %v62, %v74
  %v83 = vsub.f32 %v63, %v75
  %v84 = vsub.f32 %v64, %v76
  %v85 = vsub.f32 %v65, %v77
  %v86 = vsub.f32 %v66, %v78
  %v87 = vsub.f32 %v67, %v79
  %v88 = vsub.f32 %v68, %v80
  %v89 = vpack.c.bf16 %v82, %v81
  %v90 = vpack.c.bf16 %v84, %v83
  %v91 = vpack.c.bf16 %v86, %v85
  %v92 = vpack.c.bf16 %v88, %v87
  %v93 = vld [vmem:[%s3] sm:$0xf]
  %v94 = vld [vmem:[%s3 + $0x4] sm:$0xf]
  %v95 = vld [vmem:[%s3 + $0x8] sm:$0xf]
  %v96 = vld [vmem:[%s3 + $0xc] sm:$0xf]
  %v97 = vld [vmem:[%s3 + $0x10] sm:$0xf]
  %v98 = vld [vmem:[%s3 + $0x14] sm:$0xf]
  %v99 = vld [vmem:[%s3 + $0x18] sm:$0xf]
  %v100 = vld [vmem:[%s3 + $0x1c] sm:$0xf]
  %v101 = vld [vmem:[%s3 + $0x20] sm:$0xf]
  %v102 = vld [vmem:[%s3 + $0x24] sm:$0xf]
  %v103 = vld [vmem:[%s3 + $0x28] sm:$0xf]
  %v104 = vld [vmem:[%s3 + $0x2c] sm:$0xf]
  %v105 = vld [vmem:[%s3 + $0x30] sm:$0xf]
  %v106 = vld [vmem:[%s3 + $0x34] sm:$0xf]
  %v107 = vld [vmem:[%s3 + $0x38] sm:$0xf]
  %v108 = vld [vmem:[%s3 + $0x3c] sm:$0xf]
  %v125 = vunpack.c.l.b16 %v93
  %v126 = vunpack.c.l.b16 %v94
  %v127 = vunpack.c.l.b16 %v95
  %v128 = vunpack.c.l.b16 %v96
  %v129 = vunpack.c.l.b16 %v97
  %v130 = vunpack.c.l.b16 %v98
  %v131 = vunpack.c.l.b16 %v99
  %v132 = vunpack.c.l.b16 %v100
  %v133 = vunpack.c.l.b16 %v101
  %v134 = vunpack.c.l.b16 %v102
  %v135 = vunpack.c.l.b16 %v103
  %v136 = vunpack.c.l.b16 %v104
  %v137 = vunpack.c.l.b16 %v105
  %v138 = vunpack.c.l.b16 %v106
  %v139 = vunpack.c.l.b16 %v107
  %v140 = vunpack.c.l.b16 %v108
  %v141 = vpack.c.b16 %v126, %v125
  %v142 = vpack.c.b16 %v128, %v127
  %v143 = vpack.c.b16 %v130, %v129
  %v144 = vpack.c.b16 %v132, %v131
  %v145 = vpack.c.b16 %v134, %v133
  %v146 = vpack.c.b16 %v136, %v135
  %v147 = vpack.c.b16 %v138, %v137
  %v148 = vpack.c.b16 %v140, %v139
  %157 = vmatprep.subr.bf16.mxu0 0
  %158 = vmatpush1.bf16.msra.mxu0 %v141
  %159 = vmatprep.subr.bf16.mxu0 0
  %160 = vmatpush1.bf16.msra.mxu0 %v142
  %161 = vmatprep.subr.bf16.mxu0 0
  %162 = vmatpush1.bf16.msra.mxu0 %v143
  %163 = vmatprep.subr.bf16.mxu0 0
  %164 = vmatpush1.bf16.msra.mxu0 %v144
  %165 = vmatprep.subr.bf16.mxu0 0
  %166 = vmatpush1.bf16.msra.mxu0 %v145
  %167 = vmatprep.subr.bf16.mxu0 0
  %168 = vmatpush1.bf16.msra.mxu0 %v146
  %169 = vmatprep.subr.bf16.mxu0 0
  %170 = vmatpush1.bf16.msra.mxu0 %v147
  %171 = vmatprep.subr.bf16.mxu0 0
  %172 = vmatpush1.bf16.msra.mxu0 %v148
  %173 = vmatprep.subr.bf16.mxu0 0
  %174 = vmatpush1.bf16.msra.mxu0 0
  %175 = vmatprep.subr.bf16.mxu0 0
  %176 = vmatpush1.bf16.msra.mxu0 0
  %177 = vmatprep.subr.bf16.mxu0 0
  %178 = vmatpush1.bf16.msra.mxu0 0
  %179 = vmatprep.subr.bf16.mxu0 0
  %180 = vmatpush1.bf16.msra.mxu0 0
  %181 = vmatprep.subr.bf16.mxu0 0
  %182 = vmatpush1.bf16.msra.mxu0 0
  %183 = vmatprep.subr.bf16.mxu0 0
  %184 = vmatpush1.bf16.msra.mxu0 0
  %185 = vmatprep.subr.bf16.mxu0 0
  %186 = vmatpush1.bf16.msra.mxu0 0
  %187 = vmatprep.subr.bf16.mxu0 0
  %188 = vmatpush1.bf16.msra.mxu0 0
  %189 = vmatprep.mubr.bf16.mxu0 0
  %190 = vmatmul.mubr.bf16.gmra.mrb[0].mxu0 %v89
  %v191 = vpop.f32.mrb[0].mxu0
  %v192 = vadd.f32 0.0, %v191
  %v193 = vpop.f32.mrb[0].mxu0
  %v194 = vpop.f32.mrb[0].mxu0
  %v195 = vadd.f32 0.0, %v194
  %v196 = vpop.f32.mrb[0].mxu0
  %197 = vmatprep.mubr.bf16.mxu0 0
  %198 = vmatmul.mubr.bf16.gmra.mrb[0].mxu0 %v90
  %v199 = vpop.f32.mrb[0].mxu0
  %v200 = vadd.f32 0.0, %v199
  %v201 = vpop.f32.mrb[0].mxu0
  %v202 = vpop.f32.mrb[0].mxu0
  %v203 = vadd.f32 0.0, %v202
  %v204 = vpop.f32.mrb[0].mxu0
  %205 = vmatprep.mubr.bf16.mxu0 0
  %206 = vmatmul.mubr.bf16.gmra.mrb[0].mxu0 %v91
  %v207 = vpop.f32.mrb[0].mxu0
  %v208 = vadd.f32 0.0, %v207
  %v209 = vpop.f32.mrb[0].mxu0
  %v210 = vpop.f32.mrb[0].mxu0
  %v211 = vadd.f32 0.0, %v210
  %v212 = vpop.f32.mrb[0].mxu0
  %213 = vmatprep.mubr.bf16.mxu0 0
  %214 = vmatmul.mubr.bf16.gmra.mrb[0].mxu0 %v92
  %v215 = vpop.f32.mrb[0].mxu0
  %v216 = vadd.f32 0.0, %v215
  %v217 = vpop.f32.mrb[0].mxu0
  %v218 = vpop.f32.mrb[0].mxu0
  %v219 = vadd.f32 0.0, %v218
  %v220 = vpop.f32.mrb[0].mxu0
  %221 = vdwg.mxu0
  %222 = vmatprep.subr.bf16.mxu0 0
  %223 = vmatpush1.bf16.msra.mxu0 %v141
  %224 = vmatprep.subr.bf16.mxu0 0
  %225 = vmatpush1.bf16.msra.mxu0 %v142
  %226 = vmatprep.subr.bf16.mxu0 0
  %227 = vmatpush1.bf16.msra.mxu0 %v143
  %228 = vmatprep.subr.bf16.mxu0 0
  %229 = vmatpush1.bf16.msra.mxu0 %v144
  %230 = vmatprep.subr.bf16.mxu0 0
  %231 = vmatpush1.bf16.msra.mxu0 %v145
  %232 = vmatprep.subr.bf16.mxu0 0
  %233 = vmatpush1.bf16.msra.mxu0 %v146
  %234 = vmatprep.subr.bf16.mxu0 0
  %235 = vmatpush1.bf16.msra.mxu0 %v147
  %236 = vmatprep.subr.bf16.mxu0 0
  %237 = vmatpush1.bf16.msra.mxu0 %v148
  %238 = vmatprep.subr.bf16.mxu0 0
  %239 = vmatpush1.bf16.msra.mxu0 0
  %240 = vmatprep.subr.bf16.mxu0 0
  %241 = vmatpush1.bf16.msra.mxu0 0
  %242 = vmatprep.subr.bf16.mxu0 0
  %243 = vmatpush1.bf16.msra.mxu0 0
  %244 = vmatprep.subr.bf16.mxu0 0
  %245 = vmatpush1.bf16.msra.mxu0 0
  %246 = vmatprep.subr.bf16.mxu0 0
  %247 = vmatpush1.bf16.msra.mxu0 0
  %248 = vmatprep.subr.bf16.mxu0 0
  %249 = vmatpush1.bf16.msra.mxu0 0
  %250 = vmatprep.subr.bf16.mxu0 0
  %251 = vmatpush1.bf16.msra.mxu0 0
  %252 = vmatprep.subr.bf16.mxu0 0
  %253 = vmatpush1.bf16.msra.mxu0 0
  %254 = vmatprep.mubr.bf16.mxu0 0
  %255 = vmatmul.mubr.bf16.gmra.mrb[0].mxu0 %v69
  %v256 = vpop.f32.mrb[0].mxu0
  %v257 = vadd.f32 %v192, %v256
  %v258 = vpop.f32.mrb[0].mxu0
  %v259 = vpop.f32.mrb[0].mxu0
  %v260 = vadd.f32 %v195, %v259
  %v261 = vpop.f32.mrb[0].mxu0
  %262 = vmatprep.mubr.bf16.mxu0 0
  %263 = vmatmul.mubr.bf16.gmra.mrb[0].mxu0 %v70
  %v264 = vpop.f32.mrb[0].mxu0
  %v265 = vadd.f32 %v200, %v264
  %v266 = vpop.f32.mrb[0].mxu0
  %v267 = vpop.f32.mrb[0].mxu0
  %v268 = vadd.f32 %v203, %v267
  %v269 = vpop.f32.mrb[0].mxu0
  %270 = vmatprep.mubr.bf16.mxu0 0
  %271 = vmatmul.mubr.bf16.gmra.mrb[0].mxu0 %v71
  %v272 = vpop.f32.mrb[0].mxu0
  %v273 = vadd.f32 %v208, %v272
  %v274 = vpop.f32.mrb[0].mxu0
  %v275 = vpop.f32.mrb[0].mxu0
  %v276 = vadd.f32 %v211, %v275
  %v277 = vpop.f32.mrb[0].mxu0
  %278 = vmatprep.mubr.bf16.mxu0 0
  %279 = vmatmul.mubr.bf16.gmra.mrb[0].mxu0 %v72
  %v280 = vpop.f32.mrb[0].mxu0
  %v281 = vadd.f32 %v216, %v280
  %v282 = vpop.f32.mrb[0].mxu0
  %v283 = vpop.f32.mrb[0].mxu0
  %v284 = vadd.f32 %v219, %v283
  %v285 = vpop.f32.mrb[0].mxu0
  %286 = vdwg.mxu0
  %v287 = vld [vmem:[#allocation2] sm:$0x1]
  %v289 = vlaneseq
  %v290 = vshrl.u32 %v289, 7
  %v291 = vsub.s32 0, %v290
  %v292 = vrot.slane %v287, %v291
  %293 = vset.pattern.permute.xlu0 0
  %294 = vperm.xlu0 %293, %v292
  %v295 = vpop.permute.xlu0 %294
  %v297 = vadd.f32 %v257, %v295
  %v298 = vadd.f32 %v260, %v295
  %v299 = vadd.f32 %v265, %v295
  %v300 = vadd.f32 %v268, %v295
  %v301 = vadd.f32 %v273, %v295
  %v302 = vadd.f32 %v276, %v295
  %v303 = vadd.f32 %v281, %v295
  %v304 = vadd.f32 %v284, %v295
  %vm305 = vcmask 31744
  %306 = vst.msk [vmem:[%s5] sm:$0xff] %vm305, %v297
  %307 = vst.msk [vmem:[%s5 + $0x8] sm:$0xff] %vm305, %v298
  %308 = vst.msk [vmem:[%s5 + $0x10] sm:$0xff] %vm305, %v299
  %309 = vst.msk [vmem:[%s5 + $0x18] sm:$0xff] %vm305, %v300
  %310 = vst.msk [vmem:[%s5 + $0x20] sm:$0xff] %vm305, %v301
  %311 = vst.msk [vmem:[%s5 + $0x28] sm:$0xff] %vm305, %v302
  %312 = vst.msk [vmem:[%s5 + $0x30] sm:$0xff] %vm305, %v303
  %313 = vst.msk [vmem:[%s5 + $0x38] sm:$0xff] %vm305, %v304
  // Predicated region
  $region22: #{tpu_custom_call.1} parent=0 // pred_check
    _
  $region23: #{tpu_custom_call.1} parent=0 // pred_check_branch
    %315 = sbr.rel (0) target = $region25
  $region24: #{tpu_custom_call.1} parent=0 // pred_region
    _
  $region25: #{tpu_custom_call.1} parent=0 // pred_fallthru
    _
  // Predicated region
  $region26: #{tpu_custom_call.1} parent=0 // pred_check
    _
  $region27: #{tpu_custom_call.1} parent=0 // pred_check_branch
    %317 = sbr.rel (0) target = $region29
  $region28: #{tpu_custom_call.1} parent=0 // pred_region
    _
  $region29: #{tpu_custom_call.1} parent=0 // pred_fallthru
    _

</llo_original>
